<compile_context>
chip_gen: v7x
topology: tpu7x:2x2x1
jax: 0.10.0
libtpu: 0.0.40
codegen_flags: <defaults>
</compile_context>

<pallas_src>
import functools

import jax
import jax.numpy as jnp
from jax.experimental import pallas as pl
from jax.experimental.pallas import tpu as pltpu


def lstm_fc_kernel(x_ref,      # (T*B, D)  time-major flattened input
                   wih_ref,    # (D, 4H)   input->gates weights ([i|f|o|g])
                   whh_ref,    # (H, 4H)   hidden->gates weights ([i|f|o|g])
                   b_ref,      # (1, 4H)   b_ih + b_hh (permuted to [i|f|o|g])
                   wfc_ref,    # (1, H)    final linear weight row
                   bfc_ref,    # (1,)      final linear bias (SMEM scalar)
                   out_ref,    # (B, 1)    output
                   xg_ref,     # (T*B, 4H) VMEM scratch: hoisted input projection
                   *, B, T):
    H = whh_ref.shape[0]

    # --- Hoisted input projection: one matmul + bias for all steps, off the
    #     serial path, parked in VMEM scratch (keeps vreg pressure flat). ---
    xg_ref[...] = (jnp.dot(x_ref[...], wih_ref[...],
                           preferred_element_type=jnp.float32)
                   + b_ref[...])                          # (T*B, 4H)

    # --- Recurrence: W_hh loaded once, h/c live in vregs. ---
    whh = whh_ref[...]                                    # held across all steps
    h = jnp.zeros((B, H), jnp.float32)
    c = jnp.zeros((B, H), jnp.float32)
    # T is small & static -> fully unrolled.
    # TODO(synk): switch to lax.fori_loop(..., unroll=True) carrying (h, c) if
    # T grows beyond ~16.
    for t in range(T):
        # Time-major layout -> contiguous static row slice per step.
        gates = (xg_ref[t * B:(t + 1) * B, :]
                 + jnp.dot(h, whh, preferred_element_type=jnp.float32))  # (B, 4H)
        # Gate order [i, f, o, g]: one sigmoid over 3H lanes, one tanh over H.
        sig = jax.nn.sigmoid(gates[:, :3 * H])
        i = sig[:, 0 * H:1 * H]
        f = sig[:, 1 * H:2 * H]
        o = sig[:, 2 * H:3 * H]
        g = jnp.tanh(gates[:, 3 * H:4 * H])
        c = f * c + i * g
        h = o * jnp.tanh(c)

    # --- Final linear layer on the VPU/XLU: mul + lane reduce (no 1-lane MXU
    #     matmul round trip); bias comes from SMEM. ---
    out_ref[...] = (jnp.sum(h * wfc_ref[...], axis=-1, keepdims=True)
                    + bfc_ref[0])


def prepare_params(params):
    """One-time parameter preprocessing (do NOT call per forward step).

    Permutes PyTorch gate blocks [i, f, g, o] -> [i, f, o, g] so the kernel can
    coalesce the three sigmoids, transposes weights for row-major matmuls, and
    fuses the two LSTM biases.
    """
    H = params["w_hh"].shape[1]
    perm = jnp.concatenate([jnp.arange(0, 2 * H),
                            jnp.arange(3 * H, 4 * H),
                            jnp.arange(2 * H, 3 * H)])
    return {
        "w_ih_t": jnp.asarray(params["w_ih"]).T[:, perm],          # (D, 4H)
        "w_hh_t": jnp.asarray(params["w_hh"]).T[:, perm],          # (H, 4H)
        "bias": (params["b_ih"] + params["b_hh"])[perm].reshape(1, 4 * H),
        "w_fc_row": jnp.asarray(params["w_fc"]).reshape(1, -1),    # (1, H)
        "b_fc": jnp.asarray(params["b_fc"]).reshape(1),            # (1,)
    }


@jax.jit
def multi_feature_lstm(x, prep):
    """x: (B, T, D) float32, batch_first like PyTorch. Returns (B, 1)."""
    B, T, D = x.shape
    H = prep["w_hh_t"].shape[0]

    # Time-major layout so per-step slices inside the kernel are contiguous.
    x_tm = jnp.transpose(x, (1, 0, 2)).reshape(T * B, D)   # (T*B, D)

    vmem = pl.BlockSpec(memory_space=pltpu.MemorySpace.VMEM)
    smem = pl.BlockSpec(memory_space=pltpu.MemorySpace.SMEM)
    return pl.pallas_call(
        functools.partial(lstm_fc_kernel, B=B, T=T),
        out_shape=jax.ShapeDtypeStruct((B, 1), jnp.float32),
        in_specs=[vmem, vmem, vmem, vmem, vmem, smem],
        out_specs=vmem,
        scratch_shapes=[pltpu.VMEM((T * B, 4 * H), jnp.float32)],
    )(x_tm, prep["w_ih_t"], prep["w_hh_t"], prep["bias"],
      prep["w_fc_row"], prep["b_fc"])


def init_params(key, input_size=3, hidden_size=16):
    """Deterministic init mimicking PyTorch's U(-1/sqrt(H), 1/sqrt(H))."""
    ks = jax.random.split(key, 6)
    bound = 1.0 / jnp.sqrt(hidden_size)
    u = lambda k, shape: jax.random.uniform(
        k, shape, dtype=jnp.float32, minval=-bound, maxval=bound)
    return {
        "w_ih": u(ks[0], (4 * hidden_size, input_size)),   # PyTorch weight_ih_l0
        "w_hh": u(ks[1], (4 * hidden_size, hidden_size)),  # PyTorch weight_hh_l0
        "b_ih": u(ks[2], (4 * hidden_size,)),
        "b_hh": u(ks[3], (4 * hidden_size,)),
        "w_fc": u(ks[4], (1, hidden_size)),                # PyTorch fc.weight
        "b_fc": u(ks[5], (1,)),                            # PyTorch fc.bias
    }


def reference_forward(x, params):
    """Pure-JAX reference with identical PyTorch LSTM semantics (gate order i,f,g,o)."""
    B, T, D = x.shape
    H = params["w_hh"].shape[0] // 4
    h = jnp.zeros((B, H), jnp.float32)
    c = jnp.zeros((B, H), jnp.float32)
    bias = params["b_ih"] + params["b_hh"]
    for t in range(T):
        gates = x[:, t, :] @ params["w_ih"].T + h @ params["w_hh"].T + bias
        i = jax.nn.sigmoid(gates[:, 0 * H:1 * H])
        f = jax.nn.sigmoid(gates[:, 1 * H:2 * H])
        g = jnp.tanh(gates[:, 2 * H:3 * H])
        o = jax.nn.sigmoid(gates[:, 3 * H:4 * H])
        c = f * c + i * g
        h = o * jnp.tanh(c)
    return h @ params["w_fc"].T + params["b_fc"]


if __name__ == "__main__":
    B, T, D, H = 2, 8, 3, 16
    key = jax.random.PRNGKey(0)
    kx, kp = jax.random.split(key)
    x = jax.random.normal(kx, (B, T, D), dtype=jnp.float32)
    params = init_params(kp, input_size=D, hidden_size=H)

    prep = prepare_params(params)        # one-time weight prep, off the hot path
    out = multi_feature_lstm(x, prep)
    out = jax.block_until_ready(out)

    ref = reference_forward(x, params)
    assert out.shape == (B, 1)
    # Tolerance relaxed vs 1e-5: TPU EUP sigmoid/tanh are polynomial approximations.
    assert jnp.allclose(out, ref, atol=1e-4, rtol=1e-4), (out, ref)
    print("KERNEL_OK")
</pallas_src>

<mosaic_0001>
module attributes {stable_mosaic.version = 11 : i64} {
  func.func @lstm_fc_kernel(%arg0: memref<16x3xf32, #tpu.memory_space<vmem>>, %arg1: memref<3x64xf32, #tpu.memory_space<vmem>>, %arg2: memref<16x64xf32, #tpu.memory_space<vmem>>, %arg3: memref<1x64xf32, #tpu.memory_space<vmem>>, %arg4: memref<1x16xf32, #tpu.memory_space<vmem>>, %arg5: memref<1xf32, #tpu.memory_space<smem>>, %arg6: memref<2x1xf32, #tpu.memory_space<vmem>>, %arg7: memref<16x64xf32, #tpu.memory_space<vmem>>) attributes {dimension_semantics = [], scalar_prefetch = 0 : i64, scratch_operands = 1 : i64, tpu.core_type = #tpu.core_type<tc>} {
    %c0 = arith.constant 0 : index
    %c0_0 = arith.constant 0 : index
    %0 = vector.load %arg0[%c0, %c0_0] : memref<16x3xf32, #tpu.memory_space<vmem>>, vector<16x3xf32>
    %c0_1 = arith.constant 0 : index
    %c0_2 = arith.constant 0 : index
    %1 = vector.load %arg1[%c0_1, %c0_2] : memref<3x64xf32, #tpu.memory_space<vmem>>, vector<3x64xf32>
    %cst = arith.constant dense<0.000000e+00> : vector<16x64xf32>
    %2 = tpu.matmul %0, %1, %cst {dimension_numbers = #tpu.dot_dimension_numbers<[1], [0], [0], [1], [0, 0, 1, 1], [], []>} : vector<16x3xf32>, vector<3x64xf32>, vector<16x64xf32> -> vector<16x64xf32>
    %c0_3 = arith.constant 0 : index
    %c0_4 = arith.constant 0 : index
    %3 = vector.load %arg3[%c0_3, %c0_4] : memref<1x64xf32, #tpu.memory_space<vmem>>, vector<1x64xf32>
    %4 = vector.broadcast %3 : vector<1x64xf32> to vector<16x64xf32>
    %5 = arith.addf %2, %4 : vector<16x64xf32>
    %c0_5 = arith.constant 0 : index
    %c0_6 = arith.constant 0 : index
    %6 = vector.load %arg7[%c0_5, %c0_6] : memref<16x64xf32, #tpu.memory_space<vmem>>, vector<16x64xf32>
    tpu.vector_store %arg7[%c0_5, %c0_6], %5 {strides = array<i32>} : memref<16x64xf32, #tpu.memory_space<vmem>>, vector<16x64xf32>,
    %c0_7 = arith.constant 0 : index
    %c0_8 = arith.constant 0 : index
    %7 = vector.load %arg2[%c0_7, %c0_8] : memref<16x64xf32, #tpu.memory_space<vmem>>, vector<16x64xf32>
    %cst_9 = arith.constant 0.000000e+00 : f32
    %8 = vector.broadcast %cst_9 : f32 to vector<2x16xf32>
    %cst_10 = arith.constant 0.000000e+00 : f32
    %9 = vector.broadcast %cst_10 : f32 to vector<2x16xf32>
    %c0_11 = arith.constant 0 : index
    %c0_12 = arith.constant 0 : index
    %10 = vector.load %arg7[%c0_11, %c0_12] : memref<16x64xf32, #tpu.memory_space<vmem>>, vector<2x64xf32>
    %cst_13 = arith.constant dense<0.000000e+00> : vector<2x64xf32>
    %11 = tpu.matmul %8, %7, %cst_13 {dimension_numbers = #tpu.dot_dimension_numbers<[1], [0], [0], [1], [0, 0, 1, 1], [], []>} : vector<2x16xf32>, vector<16x64xf32>, vector<2x64xf32> -> vector<2x64xf32>
    %12 = arith.addf %10, %11 : vector<2x64xf32>
    %13 = vector.extract_strided_slice %12 {offsets = [0, 0], sizes = [2, 48], strides = [1, 1]} : vector<2x64xf32> to vector<2x48xf32>
    %14 = arith.negf %13 : vector<2x48xf32>
    %15 = math.exp %14 : vector<2x48xf32>
    %cst_14 = arith.constant 1.000000e+00 : f32
    %16 = vector.broadcast %cst_14 : f32 to vector<2x48xf32>
    %17 = arith.addf %16, %15 : vector<2x48xf32>
    %18 = arith.divf %16, %17 : vector<2x48xf32>
    %19 = vector.extract_strided_slice %18 {offsets = [0, 0], sizes = [2, 16], strides = [1, 1]} : vector<2x48xf32> to vector<2x16xf32>
    %20 = vector.extract_strided_slice %18 {offsets = [0, 16], sizes = [2, 16], strides = [1, 1]} : vector<2x48xf32> to vector<2x16xf32>
    %21 = vector.extract_strided_slice %18 {offsets = [0, 32], sizes = [2, 16], strides = [1, 1]} : vector<2x48xf32> to vector<2x16xf32>
    %22 = vector.extract_strided_slice %12 {offsets = [0, 48], sizes = [2, 16], strides = [1, 1]} : vector<2x64xf32> to vector<2x16xf32>
    %23 = math.tanh %22 : vector<2x16xf32>
    %24 = arith.mulf %20, %9 : vector<2x16xf32>
    %25 = arith.mulf %19, %23 : vector<2x16xf32>
    %26 = arith.addf %24, %25 : vector<2x16xf32>
    %27 = math.tanh %26 : vector<2x16xf32>
    %28 = arith.mulf %21, %27 : vector<2x16xf32>
    %c2 = arith.constant 2 : index
    %c0_15 = arith.constant 0 : index
    %29 = vector.load %arg7[%c2, %c0_15] : memref<16x64xf32, #tpu.memory_space<vmem>>, vector<2x64xf32>
    %cst_16 = arith.constant dense<0.000000e+00> : vector<2x64xf32>
    %30 = tpu.matmul %28, %7, %cst_16 {dimension_numbers = #tpu.dot_dimension_numbers<[1], [0], [0], [1], [0, 0, 1, 1], [], []>} : vector<2x16xf32>, vector<16x64xf32>, vector<2x64xf32> -> vector<2x64xf32>
    %31 = arith.addf %29, %30 : vector<2x64xf32>
    %32 = vector.extract_strided_slice %31 {offsets = [0, 0], sizes = [2, 48], strides = [1, 1]} : vector<2x64xf32> to vector<2x48xf32>
    %33 = arith.negf %32 : vector<2x48xf32>
    %34 = math.exp %33 : vector<2x48xf32>
    %cst_17 = arith.constant 1.000000e+00 : f32
    %35 = vector.broadcast %cst_17 : f32 to vector<2x48xf32>
    %36 = arith.addf %35, %34 : vector<2x48xf32>
    %37 = arith.divf %35, %36 : vector<2x48xf32>
    %38 = vector.extract_strided_slice %37 {offsets = [0, 0], sizes = [2, 16], strides = [1, 1]} : vector<2x48xf32> to vector<2x16xf32>
    %39 = vector.extract_strided_slice %37 {offsets = [0, 16], sizes = [2, 16], strides = [1, 1]} : vector<2x48xf32> to vector<2x16xf32>
    %40 = vector.extract_strided_slice %37 {offsets = [0, 32], sizes = [2, 16], strides = [1, 1]} : vector<2x48xf32> to vector<2x16xf32>
    %41 = vector.extract_strided_slice %31 {offsets = [0, 48], sizes = [2, 16], strides = [1, 1]} : vector<2x64xf32> to vector<2x16xf32>
    %42 = math.tanh %41 : vector<2x16xf32>
    %43 = arith.mulf %39, %26 : vector<2x16xf32>
    %44 = arith.mulf %38, %42 : vector<2x16xf32>
    %45 = arith.addf %43, %44 : vector<2x16xf32>
    %46 = math.tanh %45 : vector<2x16xf32>
    %47 = arith.mulf %40, %46 : vector<2x16xf32>
    %c4 = arith.constant 4 : index
    %c0_18 = arith.constant 0 : index
    %48 = vector.load %arg7[%c4, %c0_18] : memref<16x64xf32, #tpu.memory_space<vmem>>, vector<2x64xf32>
    %cst_19 = arith.constant dense<0.000000e+00> : vector<2x64xf32>
    %49 = tpu.matmul %47, %7, %cst_19 {dimension_numbers = #tpu.dot_dimension_numbers<[1], [0], [0], [1], [0, 0, 1, 1], [], []>} : vector<2x16xf32>, vector<16x64xf32>, vector<2x64xf32> -> vector<2x64xf32>
    %50 = arith.addf %48, %49 : vector<2x64xf32>
    %51 = vector.extract_strided_slice %50 {offsets = [0, 0], sizes = [2, 48], strides = [1, 1]} : vector<2x64xf32> to vector<2x48xf32>
    %52 = arith.negf %51 : vector<2x48xf32>
    %53 = math.exp %52 : vector<2x48xf32>
    %cst_20 = arith.constant 1.000000e+00 : f32
    %54 = vector.broadcast %cst_20 : f32 to vector<2x48xf32>
    %55 = arith.addf %54, %53 : vector<2x48xf32>
    %56 = arith.divf %54, %55 : vector<2x48xf32>
    %57 = vector.extract_strided_slice %56 {offsets = [0, 0], sizes = [2, 16], strides = [1, 1]} : vector<2x48xf32> to vector<2x16xf32>
    %58 = vector.extract_strided_slice %56 {offsets = [0, 16], sizes = [2, 16], strides = [1, 1]} : vector<2x48xf32> to vector<2x16xf32>
    %59 = vector.extract_strided_slice %56 {offsets = [0, 32], sizes = [2, 16], strides = [1, 1]} : vector<2x48xf32> to vector<2x16xf32>
    %60 = vector.extract_strided_slice %50 {offsets = [0, 48], sizes = [2, 16], strides = [1, 1]} : vector<2x64xf32> to vector<2x16xf32>
    %61 = math.tanh %60 : vector<2x16xf32>
    %62 = arith.mulf %58, %45 : vector<2x16xf32>
    %63 = arith.mulf %57, %61 : vector<2x16xf32>
    %64 = arith.addf %62, %63 : vector<2x16xf32>
    %65 = math.tanh %64 : vector<2x16xf32>
    %66 = arith.mulf %59, %65 : vector<2x16xf32>
    %c6 = arith.constant 6 : index
    %c0_21 = arith.constant 0 : index
    %67 = vector.load %arg7[%c6, %c0_21] : memref<16x64xf32, #tpu.memory_space<vmem>>, vector<2x64xf32>
    %cst_22 = arith.constant dense<0.000000e+00> : vector<2x64xf32>
    %68 = tpu.matmul %66, %7, %cst_22 {dimension_numbers = #tpu.dot_dimension_numbers<[1], [0], [0], [1], [0, 0, 1, 1], [], []>} : vector<2x16xf32>, vector<16x64xf32>, vector<2x64xf32> -> vector<2x64xf32>
    %69 = arith.addf %67, %68 : vector<2x64xf32>
    %70 = vector.extract_strided_slice %69 {offsets = [0, 0], sizes = [2, 48], strides = [1, 1]} : vector<2x64xf32> to vector<2x48xf32>
    %71 = arith.negf %70 : vector<2x48xf32>
    %72 = math.exp %71 : vector<2x48xf32>
    %cst_23 = arith.constant 1.000000e+00 : f32
    %73 = vector.broadcast %cst_23 : f32 to vector<2x48xf32>
    %74 = arith.addf %73, %72 : vector<2x48xf32>
    %75 = arith.divf %73, %74 : vector<2x48xf32>
    %76 = vector.extract_strided_slice %75 {offsets = [0, 0], sizes = [2, 16], strides = [1, 1]} : vector<2x48xf32> to vector<2x16xf32>
    %77 = vector.extract_strided_slice %75 {offsets = [0, 16], sizes = [2, 16], strides = [1, 1]} : vector<2x48xf32> to vector<2x16xf32>
    %78 = vector.extract_strided_slice %75 {offsets = [0, 32], sizes = [2, 16], strides = [1, 1]} : vector<2x48xf32> to vector<2x16xf32>
    %79 = vector.extract_strided_slice %69 {offsets = [0, 48], sizes = [2, 16], strides = [1, 1]} : vector<2x64xf32> to vector<2x16xf32>
    %80 = math.tanh %79 : vector<2x16xf32>
    %81 = arith.mulf %77, %64 : vector<2x16xf32>
    %82 = arith.mulf %76, %80 : vector<2x16xf32>
    %83 = arith.addf %81, %82 : vector<2x16xf32>
    %84 = math.tanh %83 : vector<2x16xf32>
    %85 = arith.mulf %78, %84 : vector<2x16xf32>
    %c8 = arith.constant 8 : index
    %c0_24 = arith.constant 0 : index
    %86 = vector.load %arg7[%c8, %c0_24] : memref<16x64xf32, #tpu.memory_space<vmem>>, vector<2x64xf32>
    %cst_25 = arith.constant dense<0.000000e+00> : vector<2x64xf32>
    %87 = tpu.matmul %85, %7, %cst_25 {dimension_numbers = #tpu.dot_dimension_numbers<[1], [0], [0], [1], [0, 0, 1, 1], [], []>} : vector<2x16xf32>, vector<16x64xf32>, vector<2x64xf32> -> vector<2x64xf32>
    %88 = arith.addf %86, %87 : vector<2x64xf32>
    %89 = vector.extract_strided_slice %88 {offsets = [0, 0], sizes = [2, 48], strides = [1, 1]} : vector<2x64xf32> to vector<2x48xf32>
    %90 = arith.negf %89 : vector<2x48xf32>
    %91 = math.exp %90 : vector<2x48xf32>
    %cst_26 = arith.constant 1.000000e+00 : f32
    %92 = vector.broadcast %cst_26 : f32 to vector<2x48xf32>
    %93 = arith.addf %92, %91 : vector<2x48xf32>
    %94 = arith.divf %92, %93 : vector<2x48xf32>
    %95 = vector.extract_strided_slice %94 {offsets = [0, 0], sizes = [2, 16], strides = [1, 1]} : vector<2x48xf32> to vector<2x16xf32>
    %96 = vector.extract_strided_slice %94 {offsets = [0, 16], sizes = [2, 16], strides = [1, 1]} : vector<2x48xf32> to vector<2x16xf32>
    %97 = vector.extract_strided_slice %94 {offsets = [0, 32], sizes = [2, 16], strides = [1, 1]} : vector<2x48xf32> to vector<2x16xf32>
    %98 = vector.extract_strided_slice %88 {offsets = [0, 48], sizes = [2, 16], strides = [1, 1]} : vector<2x64xf32> to vector<2x16xf32>
    %99 = math.tanh %98 : vector<2x16xf32>
    %100 = arith.mulf %96, %83 : vector<2x16xf32>
    %101 = arith.mulf %95, %99 : vector<2x16xf32>
    %102 = arith.addf %100, %101 : vector<2x16xf32>
    %103 = math.tanh %102 : vector<2x16xf32>
    %104 = arith.mulf %97, %103 : vector<2x16xf32>
    %c10 = arith.constant 10 : index
    %c0_27 = arith.constant 0 : index
    %105 = vector.load %arg7[%c10, %c0_27] : memref<16x64xf32, #tpu.memory_space<vmem>>, vector<2x64xf32>
    %cst_28 = arith.constant dense<0.000000e+00> : vector<2x64xf32>
    %106 = tpu.matmul %104, %7, %cst_28 {dimension_numbers = #tpu.dot_dimension_numbers<[1], [0], [0], [1], [0, 0, 1, 1], [], []>} : vector<2x16xf32>, vector<16x64xf32>, vector<2x64xf32> -> vector<2x64xf32>
    %107 = arith.addf %105, %106 : vector<2x64xf32>
    %108 = vector.extract_strided_slice %107 {offsets = [0, 0], sizes = [2, 48], strides = [1, 1]} : vector<2x64xf32> to vector<2x48xf32>
    %109 = arith.negf %108 : vector<2x48xf32>
    %110 = math.exp %109 : vector<2x48xf32>
    %cst_29 = arith.constant 1.000000e+00 : f32
    %111 = vector.broadcast %cst_29 : f32 to vector<2x48xf32>
    %112 = arith.addf %111, %110 : vector<2x48xf32>
    %113 = arith.divf %111, %112 : vector<2x48xf32>
    %114 = vector.extract_strided_slice %113 {offsets = [0, 0], sizes = [2, 16], strides = [1, 1]} : vector<2x48xf32> to vector<2x16xf32>
    %115 = vector.extract_strided_slice %113 {offsets = [0, 16], sizes = [2, 16], strides = [1, 1]} : vector<2x48xf32> to vector<2x16xf32>
    %116 = vector.extract_strided_slice %113 {offsets = [0, 32], sizes = [2, 16], strides = [1, 1]} : vector<2x48xf32> to vector<2x16xf32>
    %117 = vector.extract_strided_slice %107 {offsets = [0, 48], sizes = [2, 16], strides = [1, 1]} : vector<2x64xf32> to vector<2x16xf32>
    %118 = math.tanh %117 : vector<2x16xf32>
    %119 = arith.mulf %115, %102 : vector<2x16xf32>
    %120 = arith.mulf %114, %118 : vector<2x16xf32>
    %121 = arith.addf %119, %120 : vector<2x16xf32>
    %122 = math.tanh %121 : vector<2x16xf32>
    %123 = arith.mulf %116, %122 : vector<2x16xf32>
    %c12 = arith.constant 12 : index
    %c0_30 = arith.constant 0 : index
    %124 = vector.load %arg7[%c12, %c0_30] : memref<16x64xf32, #tpu.memory_space<vmem>>, vector<2x64xf32>
    %cst_31 = arith.constant dense<0.000000e+00> : vector<2x64xf32>
    %125 = tpu.matmul %123, %7, %cst_31 {dimension_numbers = #tpu.dot_dimension_numbers<[1], [0], [0], [1], [0, 0, 1, 1], [], []>} : vector<2x16xf32>, vector<16x64xf32>, vector<2x64xf32> -> vector<2x64xf32>
    %126 = arith.addf %124, %125 : vector<2x64xf32>
    %127 = vector.extract_strided_slice %126 {offsets = [0, 0], sizes = [2, 48], strides = [1, 1]} : vector<2x64xf32> to vector<2x48xf32>
    %128 = arith.negf %127 : vector<2x48xf32>
    %129 = math.exp %128 : vector<2x48xf32>
    %cst_32 = arith.constant 1.000000e+00 : f32
    %130 = vector.broadcast %cst_32 : f32 to vector<2x48xf32>
    %131 = arith.addf %130, %129 : vector<2x48xf32>
    %132 = arith.divf %130, %131 : vector<2x48xf32>
    %133 = vector.extract_strided_slice %132 {offsets = [0, 0], sizes = [2, 16], strides = [1, 1]} : vector<2x48xf32> to vector<2x16xf32>
    %134 = vector.extract_strided_slice %132 {offsets = [0, 16], sizes = [2, 16], strides = [1, 1]} : vector<2x48xf32> to vector<2x16xf32>
    %135 = vector.extract_strided_slice %132 {offsets = [0, 32], sizes = [2, 16], strides = [1, 1]} : vector<2x48xf32> to vector<2x16xf32>
    %136 = vector.extract_strided_slice %126 {offsets = [0, 48], sizes = [2, 16], strides = [1, 1]} : vector<2x64xf32> to vector<2x16xf32>
    %137 = math.tanh %136 : vector<2x16xf32>
    %138 = arith.mulf %134, %121 : vector<2x16xf32>
    %139 = arith.mulf %133, %137 : vector<2x16xf32>
    %140 = arith.addf %138, %139 : vector<2x16xf32>
    %141 = math.tanh %140 : vector<2x16xf32>
    %142 = arith.mulf %135, %141 : vector<2x16xf32>
    %c14 = arith.constant 14 : index
    %c0_33 = arith.constant 0 : index
    %143 = vector.load %arg7[%c14, %c0_33] : memref<16x64xf32, #tpu.memory_space<vmem>>, vector<2x64xf32>
    %cst_34 = arith.constant dense<0.000000e+00> : vector<2x64xf32>
    %144 = tpu.matmul %142, %7, %cst_34 {dimension_numbers = #tpu.dot_dimension_numbers<[1], [0], [0], [1], [0, 0, 1, 1], [], []>} : vector<2x16xf32>, vector<16x64xf32>, vector<2x64xf32> -> vector<2x64xf32>
    %145 = arith.addf %143, %144 : vector<2x64xf32>
    %146 = vector.extract_strided_slice %145 {offsets = [0, 0], sizes = [2, 48], strides = [1, 1]} : vector<2x64xf32> to vector<2x48xf32>
    %147 = arith.negf %146 : vector<2x48xf32>
    %148 = math.exp %147 : vector<2x48xf32>
    %cst_35 = arith.constant 1.000000e+00 : f32
    %149 = vector.broadcast %cst_35 : f32 to vector<2x48xf32>
    %150 = arith.addf %149, %148 : vector<2x48xf32>
    %151 = arith.divf %149, %150 : vector<2x48xf32>
    %152 = vector.extract_strided_slice %151 {offsets = [0, 0], sizes = [2, 16], strides = [1, 1]} : vector<2x48xf32> to vector<2x16xf32>
    %153 = vector.extract_strided_slice %151 {offsets = [0, 16], sizes = [2, 16], strides = [1, 1]} : vector<2x48xf32> to vector<2x16xf32>
    %154 = vector.extract_strided_slice %151 {offsets = [0, 32], sizes = [2, 16], strides = [1, 1]} : vector<2x48xf32> to vector<2x16xf32>
    %155 = vector.extract_strided_slice %145 {offsets = [0, 48], sizes = [2, 16], strides = [1, 1]} : vector<2x64xf32> to vector<2x16xf32>
    %156 = math.tanh %155 : vector<2x16xf32>
    %157 = arith.mulf %153, %140 : vector<2x16xf32>
    %158 = arith.mulf %152, %156 : vector<2x16xf32>
    %159 = arith.addf %157, %158 : vector<2x16xf32>
    %160 = math.tanh %159 : vector<2x16xf32>
    %161 = arith.mulf %154, %160 : vector<2x16xf32>
    %c0_36 = arith.constant 0 : index
    %c0_37 = arith.constant 0 : index
    %162 = vector.load %arg4[%c0_36, %c0_37] : memref<1x16xf32, #tpu.memory_space<vmem>>, vector<1x16xf32>
    %163 = vector.broadcast %162 : vector<1x16xf32> to vector<2x16xf32>
    %164 = arith.mulf %161, %163 : vector<2x16xf32>
    %cst_38 = arith.constant dense<0.000000e+00> : vector<2xf32>
    %165 = vector.multi_reduction <add>, %164, %cst_38 [1] : vector<2x16xf32> to vector<2xf32>
    %166 = vector.shape_cast %165 : vector<2xf32> to vector<2x1xf32>
    %c0_39 = arith.constant 0 : index
    %167 = memref.load %arg5[%c0_39] : memref<1xf32, #tpu.memory_space<smem>>
    %168 = vector.broadcast %167 : f32 to vector<2x1xf32>
    %169 = arith.addf %166, %168 : vector<2x1xf32>
    %c0_40 = arith.constant 0 : index
    %c0_41 = arith.constant 0 : index
    %170 = vector.load %arg6[%c0_40, %c0_41] : memref<2x1xf32, #tpu.memory_space<vmem>>, vector<2x1xf32>
    tpu.vector_store %arg6[%c0_40, %c0_41], %169 {strides = array<i32>} : memref<2x1xf32, #tpu.memory_space<vmem>>, vector<2x1xf32>,
    return
  }
}

</mosaic_0001>

<llo_original>
// kernel: multi_feature_lstm.1
$region0: #{multi_feature_lstm.1}
  #allocation0 [shape = 'u32[]', space=smem, size = 0x4, offset = 0x4, fixed_abs, tag = 'smem constant byte address 0x4 - core index']
  #allocation1 [shape = 'u32[144,128]{1,0:T(1,128)}', space=vmem, size = 0x12000, scoped, tag = 'internal scratch']
  #allocation2 [shape = 'f32[16,64]{1,0:T(8,128)}', space=vmem, size = 0x2000, scoped, tag = 'scratch operand']
  #allocation3 [shape = 'f32[1]{0:T(128)S(6)}', space=smem, size = 0x200, scoped, tag = 'scoped memory for multi_feature_lstm.1']
  %s0 = inlined_call_operand.vmem [shape: f32[16,3], index: 0, kind: input, shape index: {}]
  %s1 = inlined_call_operand.vmem [shape: f32[3,64], index: 1, kind: input, shape index: {}]
  %s2 = inlined_call_operand.vmem [shape: f32[16,64], index: 2, kind: input, shape index: {}]
  %s3 = inlined_call_operand.vmem [shape: f32[1,64], index: 3, kind: input, shape index: {}]
  %s4 = inlined_call_operand.vmem [shape: f32[1,16], index: 4, kind: input, shape index: {}]
  %s5 = inlined_call_operand.<no memory space> [shape: f32[1], index: 5, kind: input, shape index: {}]
  %s6 = inlined_call_operand.vmem [shape: f32[2,1], index: 6, kind: output, shape index: {}]
  %s7 = sld [smem:[#allocation0]]
  $region34: #{multi_feature_lstm.1} parent=0
    _
  %s9 = ssub.s32 1, %s7
  %s10 = scalar_select 0, %s9, %s7
  %11 = sst [smem:[#allocation3]] %s5
  // Predicated region
  $region2: #{multi_feature_lstm.1} parent=0 // pred_check
    _
  $region3: #{multi_feature_lstm.1} parent=0 // pred_check_branch
    %13 = sbr.rel (0) target = $region5
  $region4: #{multi_feature_lstm.1} parent=0 // pred_region
    _
  $region5: #{multi_feature_lstm.1} parent=0 // pred_fallthru
    _
  // Predicated region
  $region6: #{multi_feature_lstm.1} parent=0 // pred_check
    _
  $region7: #{multi_feature_lstm.1} parent=0 // pred_check_branch
    %15 = sbr.rel (0) target = $region9
  $region8: #{multi_feature_lstm.1} parent=0 // pred_region
    _
  $region9: #{multi_feature_lstm.1} parent=0 // pred_fallthru
    _
  // Predicated region
  $region10: #{multi_feature_lstm.1} parent=0 // pred_check
    _
  $region11: #{multi_feature_lstm.1} parent=0 // pred_check_branch
    %17 = sbr.rel (0) target = $region13
  $region12: #{multi_feature_lstm.1} parent=0 // pred_region
    _
  $region13: #{multi_feature_lstm.1} parent=0 // pred_fallthru
    _
  // Predicated region
  $region14: #{multi_feature_lstm.1} parent=0 // pred_check
    _
  $region15: #{multi_feature_lstm.1} parent=0 // pred_check_branch
    %19 = sbr.rel (0) target = $region17
  $region16: #{multi_feature_lstm.1} parent=0 // pred_region
    _
  $region17: #{multi_feature_lstm.1} parent=0 // pred_fallthru
    _
  // Predicated region
  $region18: #{multi_feature_lstm.1} parent=0 // pred_check
    _
  $region19: #{multi_feature_lstm.1} parent=0 // pred_check_branch
    %21 = sbr.rel (0) target = $region21
  $region20: #{multi_feature_lstm.1} parent=0 // pred_region
    _
  $region21: #{multi_feature_lstm.1} parent=0 // pred_fallthru
    _
  // Predicated region
  $region22: #{multi_feature_lstm.1} parent=0 // pred_check
    _
  $region23: #{multi_feature_lstm.1} parent=0 // pred_check_branch
    %23 = sbr.rel (0) target = $region25
  $region24: #{multi_feature_lstm.1} parent=0 // pred_region
    _
  $region25: #{multi_feature_lstm.1} parent=0 // pred_fallthru
    _
  %v24 = vld [vmem:[%s0] sm:$0xff]
  %v25 = vld [vmem:[%s0 + $0x8] sm:$0xff]
  %v26 = vld [vmem:[%s1] sm:$0x7]
  %v27 = vld [vmem:[%s3] sm:$0x1]
  %v29 = vlaneseq
  %v30 = vshrl.u32 %v29, 7
  %v31 = vsub.s32 0, %v30
  %v32 = vrot.slane %v27, %v31
  %vm34 = vcmask 23552
  %v36 = vsel %vm34, %v24, 0
  %v39 = vsel %vm34, %v25, 0
  %vm41 = vcmask 1042432
  %v43 = vsel %vm41, %v26, 0
  %45 = vmatprep.subr.mxu0 0.0
  %46 = vmatpush1.msra.mxu0 %v43
  %47 = vmatprep.subr.mxu0 0.0
  %48 = vmatpush1.msra.mxu0 0.0
  %49 = vmatprep.subr.mxu0 0.0
  %50 = vmatpush1.msra.mxu0 0.0
  %51 = vmatprep.subr.mxu0 0.0
  %52 = vmatpush1.msra.mxu0 0.0
  %53 = vmatprep.subr.mxu0 0.0
  %54 = vmatpush1.msra.mxu0 0.0
  %55 = vmatprep.subr.mxu0 0.0
  %56 = vmatpush1.msra.mxu0 0.0
  %57 = vmatprep.subr.mxu0 0.0
  %58 = vmatpush1.msra.mxu0 0.0
  %59 = vmatprep.subr.mxu0 0.0
  %60 = vmatpush1.msra.mxu0 0.0
  %61 = vmatprep.subr.mxu0 0.0
  %62 = vmatpush1.msra.mxu0 0.0
  %63 = vmatprep.subr.mxu0 0.0
  %64 = vmatpush1.msra.mxu0 0.0
  %65 = vmatprep.subr.mxu0 0.0
  %66 = vmatpush1.msra.mxu0 0.0
  %67 = vmatprep.subr.mxu0 0.0
  %68 = vmatpush1.msra.mxu0 0.0
  %69 = vmatprep.subr.mxu0 0.0
  %70 = vmatpush1.msra.mxu0 0.0
  %71 = vmatprep.subr.mxu0 0.0
  %72 = vmatpush1.msra.mxu0 0.0
  %73 = vmatprep.subr.mxu0 0.0
  %74 = vmatpush1.msra.mxu0 0.0
  %75 = vmatprep.subr.mxu0 0.0
  %76 = vmatpush1.msra.mxu0 0.0
  %77 = vmatprep.subr.mxu0 0.0
  %78 = vmatpush1.msra.mxu0 0.0
  %79 = vmatprep.subr.mxu0 0.0
  %80 = vmatpush1.msra.mxu0 0.0
  %81 = vmatprep.subr.mxu0 0.0
  %82 = vmatpush1.msra.mxu0 0.0
  %83 = vmatprep.subr.mxu0 0.0
  %84 = vmatpush1.msra.mxu0 0.0
  %85 = vmatprep.subr.mxu0 0.0
  %86 = vmatpush1.msra.mxu0 0.0
  %87 = vmatprep.subr.mxu0 0.0
  %88 = vmatpush1.msra.mxu0 0.0
  %89 = vmatprep.subr.mxu0 0.0
  %90 = vmatpush1.msra.mxu0 0.0
  %91 = vmatprep.subr.mxu0 0.0
  %92 = vmatpush1.msra.mxu0 0.0
  %93 = vmatprep.subr.mxu0 0.0
  %94 = vmatpush1.msra.mxu0 0.0
  %95 = vmatprep.subr.mxu0 0.0
  %96 = vmatpush1.msra.mxu0 0.0
  %97 = vmatprep.subr.mxu0 0.0
  %98 = vmatpush1.msra.mxu0 0.0
  %99 = vmatprep.subr.mxu0 0.0
  %100 = vmatpush1.msra.mxu0 0.0
  %101 = vmatprep.subr.mxu0 0.0
  %102 = vmatpush1.msra.mxu0 0.0
  %103 = vmatprep.subr.mxu0 0.0
  %104 = vmatpush1.msra.mxu0 0.0
  %105 = vmatprep.subr.mxu0 0.0
  %106 = vmatpush1.msra.mxu0 0.0
  %107 = vmatprep.subr.mxu0 0.0
  %108 = vmatpush1.msra.mxu0 0.0
  %109 = vmatprep.mubr.f32.mxu0 0.0
  %110 = vmatmul.mubr.f32.gmra.mrb[0].mxu0 %v36
  %v111 = vpop.f32.mrb[0].mxu0
  %v112 = vadd.f32 %v32, %v111
  %v113 = vpop.f32.mrb[0].mxu0
  %114 = vmatprep.mubr.f32.mxu0 0.0
  %115 = vmatmul.mubr.f32.gmra.mrb[0].mxu0 %v39
  %v116 = vpop.f32.mrb[0].mxu0
  %v117 = vadd.f32 %v32, %v116
  %v118 = vpop.f32.mrb[0].mxu0
  %119 = vdwg.mxu0
  %vm120 = vcmask 523264
  %121 = vst.msk [vmem:[#allocation2] sm:$0xff] %vm120, %v112
  %122 = vst.msk [vmem:[#allocation2 + $0x8] sm:$0xff] %vm120, %v117
  %v123 = vld [vmem:[%s2] sm:$0xff]
  %v124 = vld [vmem:[%s2 + $0x8] sm:$0xff]
  %v125 = vld [vmem:[#allocation2] sm:$0x3]
  %vm126 = vcmask 130048
  %v128 = vsel %vm126, 0.0, 0
  %130 = vmatprep.subr.mxu0 0.0
  %131 = vmatpush1.msra.mxu0 %v123
  %132 = vmatprep.subr.mxu0 0.0
  %133 = vmatpush1.msra.mxu0 %v124
  %134 = vmatprep.subr.mxu0 0.0
  %135 = vmatpush1.msra.mxu0 0.0
  %136 = vmatprep.subr.mxu0 0.0
  %137 = vmatpush1.msra.mxu0 0.0
  %138 = vmatprep.subr.mxu0 0.0
  %139 = vmatpush1.msra.mxu0 0.0
  %140 = vmatprep.subr.mxu0 0.0
  %141 = vmatpush1.msra.mxu0 0.0
  %142 = vmatprep.subr.mxu0 0.0
  %143 = vmatpush1.msra.mxu0 0.0
  %144 = vmatprep.subr.mxu0 0.0
  %145 = vmatpush1.msra.mxu0 0.0
  %146 = vmatprep.subr.mxu0 0.0
  %147 = vmatpush1.msra.mxu0 0.0
  %148 = vmatprep.subr.mxu0 0.0
  %149 = vmatpush1.msra.mxu0 0.0
  %150 = vmatprep.subr.mxu0 0.0
  %151 = vmatpush1.msra.mxu0 0.0
  %152 = vmatprep.subr.mxu0 0.0
  %153 = vmatpush1.msra.mxu0 0.0
  %154 = vmatprep.subr.mxu0 0.0
  %155 = vmatpush1.msra.mxu0 0.0
  %156 = vmatprep.subr.mxu0 0.0
  %157 = vmatpush1.msra.mxu0 0.0
  %158 = vmatprep.subr.mxu0 0.0
  %159 = vmatpush1.msra.mxu0 0.0
  %160 = vmatprep.subr.mxu0 0.0
  %161 = vmatpush1.msra.mxu0 0.0
  %162 = vmatprep.subr.mxu0 0.0
  %163 = vmatpush1.msra.mxu0 0.0
  %164 = vmatprep.subr.mxu0 0.0
  %165 = vmatpush1.msra.mxu0 0.0
  %166 = vmatprep.subr.mxu0 0.0
  %167 = vmatpush1.msra.mxu0 0.0
  %168 = vmatprep.subr.mxu0 0.0
  %169 = vmatpush1.msra.mxu0 0.0
  %170 = vmatprep.subr.mxu0 0.0
  %171 = vmatpush1.msra.mxu0 0.0
  %172 = vmatprep.subr.mxu0 0.0
  %173 = vmatpush1.msra.mxu0 0.0
  %174 = vmatprep.subr.mxu0 0.0
  %175 = vmatpush1.msra.mxu0 0.0
  %176 = vmatprep.subr.mxu0 0.0
  %177 = vmatpush1.msra.mxu0 0.0
  %178 = vmatprep.subr.mxu0 0.0
  %179 = vmatpush1.msra.mxu0 0.0
  %180 = vmatprep.subr.mxu0 0.0
  %181 = vmatpush1.msra.mxu0 0.0
  %182 = vmatprep.subr.mxu0 0.0
  %183 = vmatpush1.msra.mxu0 0.0
  %184 = vmatprep.subr.mxu0 0.0
  %185 = vmatpush1.msra.mxu0 0.0
  %186 = vmatprep.subr.mxu0 0.0
  %187 = vmatpush1.msra.mxu0 0.0
  %188 = vmatprep.subr.mxu0 0.0
  %189 = vmatpush1.msra.mxu0 0.0
  %190 = vmatprep.subr.mxu0 0.0
  %191 = vmatpush1.msra.mxu0 0.0
  %192 = vmatprep.subr.mxu0 0.0
  %193 = vmatpush1.msra.mxu0 0.0
  %194 = vmatprep.mubr.f32.mxu0 0.0
  %195 = vmatmul.mubr.f32.gmra.mrb[0].mxu0 %v128
  %v196 = vpop.f32.mrb[0].mxu0
  %v197 = vadd.f32 0.0, %v196
  %v198 = vpop.f32.mrb[0].mxu0
  %199 = vdwg.mxu0
  %v200 = vadd.f32 %v125, %v197
  %v201 = vxor.u32 %v200, 2147483648
  %v202 = vmul.f32 %v201, 1.442695
  %v203 = vpow.pop %v202
  %v204 = vadd.f32 %v203, 1.0
  %v205 = vrcp.pop %v204
  %v206 = vmul.f32 1.0, %v205
  %v207 = vtanh.pop %v200
  %v208 = vmul.f32 %v206, 0.0
  %210 = vrot.lane.b32.xlu0 %v207, 80
  %v211 = vpop.permute.xlu0 %210
  %v213 = vmul.f32 %v206, %v211
  %215 = vrot.lane.b32.xlu0 %v213, 16
  %v216 = vpop.permute.xlu0 %215
  %v218 = vadd.f32 %v208, %v216
  %v219 = vtanh.pop %v218
  %221 = vrot.lane.b32.xlu0 %v219, 16
  %v222 = vpop.permute.xlu0 %221
  %v224 = vmul.f32 %v206, %v222
  %v225 = vld [vmem:[#allocation2 + $0x2] sm:$0x3]
  %227 = vrot.lane.b32.xlu0 %v224, 96
  %v228 = vpop.permute.xlu0 %227
  %v229 = vsel %vm126, %v228, 0
  %231 = vmatprep.subr.mxu0 0.0
  %232 = vmatpush1.msra.mxu0 %v123
  %233 = vmatprep.subr.mxu0 0.0
  %234 = vmatpush1.msra.mxu0 %v124
  %235 = vmatprep.subr.mxu0 0.0
  %236 = vmatpush1.msra.mxu0 0.0
  %237 = vmatprep.subr.mxu0 0.0
  %238 = vmatpush1.msra.mxu0 0.0
  %239 = vmatprep.subr.mxu0 0.0
  %240 = vmatpush1.msra.mxu0 0.0
  %241 = vmatprep.subr.mxu0 0.0
  %242 = vmatpush1.msra.mxu0 0.0
  %243 = vmatprep.subr.mxu0 0.0
  %244 = vmatpush1.msra.mxu0 0.0
  %245 = vmatprep.subr.mxu0 0.0
  %246 = vmatpush1.msra.mxu0 0.0
  %247 = vmatprep.subr.mxu0 0.0
  %248 = vmatpush1.msra.mxu0 0.0
  %249 = vmatprep.subr.mxu0 0.0
  %250 = vmatpush1.msra.mxu0 0.0
  %251 = vmatprep.subr.mxu0 0.0
  %252 = vmatpush1.msra.mxu0 0.0
  %253 = vmatprep.subr.mxu0 0.0
  %254 = vmatpush1.msra.mxu0 0.0
  %255 = vmatprep.subr.mxu0 0.0
  %256 = vmatpush1.msra.mxu0 0.0
  %257 = vmatprep.subr.mxu0 0.0
  %258 = vmatpush1.msra.mxu0 0.0
  %259 = vmatprep.subr.mxu0 0.0
  %260 = vmatpush1.msra.mxu0 0.0
  %261 = vmatprep.subr.mxu0 0.0
  %262 = vmatpush1.msra.mxu0 0.0
  %263 = vmatprep.subr.mxu0 0.0
  %264 = vmatpush1.msra.mxu0 0.0
  %265 = vmatprep.subr.mxu0 0.0
  %266 = vmatpush1.msra.mxu0 0.0
  %267 = vmatprep.subr.mxu0 0.0
  %268 = vmatpush1.msra.mxu0 0.0
  %269 = vmatprep.subr.mxu0 0.0
  %270 = vmatpush1.msra.mxu0 0.0
  %271 = vmatprep.subr.mxu0 0.0
  %272 = vmatpush1.msra.mxu0 0.0
  %273 = vmatprep.subr.mxu0 0.0
  %274 = vmatpush1.msra.mxu0 0.0
  %275 = vmatprep.subr.mxu0 0.0
  %276 = vmatpush1.msra.mxu0 0.0
  %277 = vmatprep.subr.mxu0 0.0
  %278 = vmatpush1.msra.mxu0 0.0
  %279 = vmatprep.subr.mxu0 0.0
  %280 = vmatpush1.msra.mxu0 0.0
  %281 = vmatprep.subr.mxu0 0.0
  %282 = vmatpush1.msra.mxu0 0.0
  %283 = vmatprep.subr.mxu0 0.0
  %284 = vmatpush1.msra.mxu0 0.0
  %285 = vmatprep.subr.mxu0 0.0
  %286 = vmatpush1.msra.mxu0 0.0
  %287 = vmatprep.subr.mxu0 0.0
  %288 = vmatpush1.msra.mxu0 0.0
  %289 = vmatprep.subr.mxu0 0.0
  %290 = vmatpush1.msra.mxu0 0.0
  %291 = vmatprep.subr.mxu0 0.0
  %292 = vmatpush1.msra.mxu0 0.0
  %293 = vmatprep.subr.mxu0 0.0
  %294 = vmatpush1.msra.mxu0 0.0
  %295 = vmatprep.mubr.f32.mxu0 0.0
  %296 = vmatmul.mubr.f32.gmra.mrb[0].mxu0 %v229
  %v297 = vpop.f32.mrb[0].mxu0
  %v298 = vadd.f32 0.0, %v297
  %v299 = vpop.f32.mrb[0].mxu0
  %300 = vdwg.mxu0
  %v301 = vadd.f32 %v225, %v298
  %v302 = vxor.u32 %v301, 2147483648
  %v303 = vmul.f32 %v302, 1.442695
  %v304 = vpow.pop %v303
  %v305 = vadd.f32 %v304, 1.0
  %v306 = vrcp.pop %v305
  %v307 = vmul.f32 1.0, %v306
  %v308 = vtanh.pop %v301
  %v309 = vmul.f32 %v307, %v218
  %311 = vrot.lane.b32.xlu0 %v308, 80
  %v312 = vpop.permute.xlu0 %311
  %v314 = vmul.f32 %v307, %v312
  %316 = vrot.lane.b32.xlu0 %v314, 16
  %v317 = vpop.permute.xlu0 %316
  %v319 = vadd.f32 %v309, %v317
  %v320 = vtanh.pop %v319
  %322 = vrot.lane.b32.xlu0 %v320, 16
  %v323 = vpop.permute.xlu0 %322
  %v325 = vmul.f32 %v307, %v323
  %v326 = vld [vmem:[#allocation2 + $0x4] sm:$0x3]
  %328 = vrot.lane.b32.xlu0 %v325, 96
  %v329 = vpop.permute.xlu0 %328
  %v330 = vsel %vm126, %v329, 0
  %332 = vmatprep.subr.mxu0 0.0
  %333 = vmatpush1.msra.mxu0 %v123
  %334 = vmatprep.subr.mxu0 0.0
  %335 = vmatpush1.msra.mxu0 %v124
  %336 = vmatprep.subr.mxu0 0.0
  %337 = vmatpush1.msra.mxu0 0.0
  %338 = vmatprep.subr.mxu0 0.0
  %339 = vmatpush1.msra.mxu0 0.0
  %340 = vmatprep.subr.mxu0 0.0
  %341 = vmatpush1.msra.mxu0 0.0
  %342 = vmatprep.subr.mxu0 0.0
  %343 = vmatpush1.msra.mxu0 0.0
  %344 = vmatprep.subr.mxu0 0.0
  %345 = vmatpush1.msra.mxu0 0.0
  %346 = vmatprep.subr.mxu0 0.0
  %347 = vmatpush1.msra.mxu0 0.0
  %348 = vmatprep.subr.mxu0 0.0
  %349 = vmatpush1.msra.mxu0 0.0
  %350 = vmatprep.subr.mxu0 0.0
  %351 = vmatpush1.msra.mxu0 0.0
  %352 = vmatprep.subr.mxu0 0.0
  %353 = vmatpush1.msra.mxu0 0.0
  %354 = vmatprep.subr.mxu0 0.0
  %355 = vmatpush1.msra.mxu0 0.0
  %356 = vmatprep.subr.mxu0 0.0
  %357 = vmatpush1.msra.mxu0 0.0
  %358 = vmatprep.subr.mxu0 0.0
  %359 = vmatpush1.msra.mxu0 0.0
  %360 = vmatprep.subr.mxu0 0.0
  %361 = vmatpush1.msra.mxu0 0.0
  %362 = vmatprep.subr.mxu0 0.0
  %363 = vmatpush1.msra.mxu0 0.0
  %364 = vmatprep.subr.mxu0 0.0
  %365 = vmatpush1.msra.mxu0 0.0
  %366 = vmatprep.subr.mxu0 0.0
  %367 = vmatpush1.msra.mxu0 0.0
  %368 = vmatprep.subr.mxu0 0.0
  %369 = vmatpush1.msra.mxu0 0.0
  %370 = vmatprep.subr.mxu0 0.0
  %371 = vmatpush1.msra.mxu0 0.0
  %372 = vmatprep.subr.mxu0 0.0
  %373 = vmatpush1.msra.mxu0 0.0
  %374 = vmatprep.subr.mxu0 0.0
  %375 = vmatpush1.msra.mxu0 0.0
  %376 = vmatprep.subr.mxu0 0.0
  %377 = vmatpush1.msra.mxu0 0.0
  %378 = vmatprep.subr.mxu0 0.0
  %379 = vmatpush1.msra.mxu0 0.0
  %380 = vmatprep.subr.mxu0 0.0
  %381 = vmatpush1.msra.mxu0 0.0
  %382 = vmatprep.subr.mxu0 0.0
  %383 = vmatpush1.msra.mxu0 0.0
  %384 = vmatprep.subr.mxu0 0.0
  %385 = vmatpush1.msra.mxu0 0.0
  %386 = vmatprep.subr.mxu0 0.0
  %387 = vmatpush1.msra.mxu0 0.0
  %388 = vmatprep.subr.mxu0 0.0
  %389 = vmatpush1.msra.mxu0 0.0
  %390 = vmatprep.subr.mxu0 0.0
  %391 = vmatpush1.msra.mxu0 0.0
  %392 = vmatprep.subr.mxu0 0.0
  %393 = vmatpush1.msra.mxu0 0.0
  %394 = vmatprep.subr.mxu0 0.0
  %395 = vmatpush1.msra.mxu0 0.0
  %396 = vmatprep.mubr.f32.mxu0 0.0
  %397 = vmatmul.mubr.f32.gmra.mrb[0].mxu0 %v330
  %v398 = vpop.f32.mrb[0].mxu0
  %v399 = vadd.f32 0.0, %v398
  %v400 = vpop.f32.mrb[0].mxu0
  %401 = vdwg.mxu0
  %v402 = vadd.f32 %v326, %v399
  %v403 = vxor.u32 %v402, 2147483648
  %v404 = vmul.f32 %v403, 1.442695
  %v405 = vpow.pop %v404
  %v406 = vadd.f32 %v405, 1.0
  %v407 = vrcp.pop %v406
  %v408 = vmul.f32 1.0, %v407
  %v409 = vtanh.pop %v402
  %v410 = vmul.f32 %v408, %v319
  %412 = vrot.lane.b32.xlu0 %v409, 80
  %v413 = vpop.permute.xlu0 %412
  %v415 = vmul.f32 %v408, %v413
  %417 = vrot.lane.b32.xlu0 %v415, 16
  %v418 = vpop.permute.xlu0 %417
  %v420 = vadd.f32 %v410, %v418
  %v421 = vtanh.pop %v420
  %423 = vrot.lane.b32.xlu0 %v421, 16
  %v424 = vpop.permute.xlu0 %423
  %v426 = vmul.f32 %v408, %v424
  %v427 = vld [vmem:[#allocation2 + $0x6] sm:$0x3]
  %429 = vrot.lane.b32.xlu0 %v426, 96
  %v430 = vpop.permute.xlu0 %429
  %v431 = vsel %vm126, %v430, 0
  %433 = vmatprep.subr.mxu0 0.0
  %434 = vmatpush1.msra.mxu0 %v123
  %435 = vmatprep.subr.mxu0 0.0
  %436 = vmatpush1.msra.mxu0 %v124
  %437 = vmatprep.subr.mxu0 0.0
  %438 = vmatpush1.msra.mxu0 0.0
  %439 = vmatprep.subr.mxu0 0.0
  %440 = vmatpush1.msra.mxu0 0.0
  %441 = vmatprep.subr.mxu0 0.0
  %442 = vmatpush1.msra.mxu0 0.0
  %443 = vmatprep.subr.mxu0 0.0
  %444 = vmatpush1.msra.mxu0 0.0
  %445 = vmatprep.subr.mxu0 0.0
  %446 = vmatpush1.msra.mxu0 0.0
  %447 = vmatprep.subr.mxu0 0.0
  %448 = vmatpush1.msra.mxu0 0.0
  %449 = vmatprep.subr.mxu0 0.0
  %450 = vmatpush1.msra.mxu0 0.0
  %451 = vmatprep.subr.mxu0 0.0
  %452 = vmatpush1.msra.mxu0 0.0
  %453 = vmatprep.subr.mxu0 0.0
  %454 = vmatpush1.msra.mxu0 0.0
  %455 = vmatprep.subr.mxu0 0.0
  %456 = vmatpush1.msra.mxu0 0.0
  %457 = vmatprep.subr.mxu0 0.0
  %458 = vmatpush1.msra.mxu0 0.0
  %459 = vmatprep.subr.mxu0 0.0
  %460 = vmatpush1.msra.mxu0 0.0
  %461 = vmatprep.subr.mxu0 0.0
  %462 = vmatpush1.msra.mxu0 0.0
  %463 = vmatprep.subr.mxu0 0.0
  %464 = vmatpush1.msra.mxu0 0.0
  %465 = vmatprep.subr.mxu0 0.0
  %466 = vmatpush1.msra.mxu0 0.0
  %467 = vmatprep.subr.mxu0 0.0
  %468 = vmatpush1.msra.mxu0 0.0
  %469 = vmatprep.subr.mxu0 0.0
  %470 = vmatpush1.msra.mxu0 0.0
  %471 = vmatprep.subr.mxu0 0.0
  %472 = vmatpush1.msra.mxu0 0.0
  %473 = vmatprep.subr.mxu0 0.0
  %474 = vmatpush1.msra.mxu0 0.0
  %475 = vmatprep.subr.mxu0 0.0
  %476 = vmatpush1.msra.mxu0 0.0
  %477 = vmatprep.subr.mxu0 0.0
  %478 = vmatpush1.msra.mxu0 0.0
  %479 = vmatprep.subr.mxu0 0.0
  %480 = vmatpush1.msra.mxu0 0.0
  %481 = vmatprep.subr.mxu0 0.0
  %482 = vmatpush1.msra.mxu0 0.0
  %483 = vmatprep.subr.mxu0 0.0
  %484 = vmatpush1.msra.mxu0 0.0
  %485 = vmatprep.subr.mxu0 0.0
  %486 = vmatpush1.msra.mxu0 0.0
  %487 = vmatprep.subr.mxu0 0.0
  %488 = vmatpush1.msra.mxu0 0.0
  %489 = vmatprep.subr.mxu0 0.0
  %490 = vmatpush1.msra.mxu0 0.0
  %491 = vmatprep.subr.mxu0 0.0
  %492 = vmatpush1.msra.mxu0 0.0
  %493 = vmatprep.subr.mxu0 0.0
  %494 = vmatpush1.msra.mxu0 0.0
  %495 = vmatprep.subr.mxu0 0.0
  %496 = vmatpush1.msra.mxu0 0.0
  %497 = vmatprep.mubr.f32.mxu0 0.0
  %498 = vmatmul.mubr.f32.gmra.mrb[0].mxu0 %v431
  %v499 = vpop.f32.mrb[0].mxu0
  %v500 = vadd.f32 0.0, %v499
  %v501 = vpop.f32.mrb[0].mxu0
  %502 = vdwg.mxu0
  %v503 = vadd.f32 %v427, %v500
  %v504 = vxor.u32 %v503, 2147483648
  %v505 = vmul.f32 %v504, 1.442695
  %v506 = vpow.pop %v505
  %v507 = vadd.f32 %v506, 1.0
  %v508 = vrcp.pop %v507
  %v509 = vmul.f32 1.0, %v508
  %v510 = vtanh.pop %v503
  %v511 = vmul.f32 %v509, %v420
  %513 = vrot.lane.b32.xlu0 %v510, 80
  %v514 = vpop.permute.xlu0 %513
  %v516 = vmul.f32 %v509, %v514
  %518 = vrot.lane.b32.xlu0 %v516, 16
  %v519 = vpop.permute.xlu0 %518
  %v521 = vadd.f32 %v511, %v519
  %v522 = vtanh.pop %v521
  %524 = vrot.lane.b32.xlu0 %v522, 16
  %v525 = vpop.permute.xlu0 %524
  %v527 = vmul.f32 %v509, %v525
  %v528 = vld [vmem:[#allocation2 + $0x8] sm:$0x3]
  %530 = vrot.lane.b32.xlu0 %v527, 96
  %v531 = vpop.permute.xlu0 %530
  %v532 = vsel %vm126, %v531, 0
  %534 = vmatprep.subr.mxu0 0.0
  %535 = vmatpush1.msra.mxu0 %v123
  %536 = vmatprep.subr.mxu0 0.0
  %537 = vmatpush1.msra.mxu0 %v124
  %538 = vmatprep.subr.mxu0 0.0
  %539 = vmatpush1.msra.mxu0 0.0
  %540 = vmatprep.subr.mxu0 0.0
  %541 = vmatpush1.msra.mxu0 0.0
  %542 = vmatprep.subr.mxu0 0.0
  %543 = vmatpush1.msra.mxu0 0.0
  %544 = vmatprep.subr.mxu0 0.0
  %545 = vmatpush1.msra.mxu0 0.0
  %546 = vmatprep.subr.mxu0 0.0
  %547 = vmatpush1.msra.mxu0 0.0
  %548 = vmatprep.subr.mxu0 0.0
  %549 = vmatpush1.msra.mxu0 0.0
  %550 = vmatprep.subr.mxu0 0.0
  %551 = vmatpush1.msra.mxu0 0.0
  %552 = vmatprep.subr.mxu0 0.0
  %553 = vmatpush1.msra.mxu0 0.0
  %554 = vmatprep.subr.mxu0 0.0
  %555 = vmatpush1.msra.mxu0 0.0
  %556 = vmatprep.subr.mxu0 0.0
  %557 = vmatpush1.msra.mxu0 0.0
  %558 = vmatprep.subr.mxu0 0.0
  %559 = vmatpush1.msra.mxu0 0.0
  %560 = vmatprep.subr.mxu0 0.0
  %561 = vmatpush1.msra.mxu0 0.0
  %562 = vmatprep.subr.mxu0 0.0
  %563 = vmatpush1.msra.mxu0 0.0
  %564 = vmatprep.subr.mxu0 0.0
  %565 = vmatpush1.msra.mxu0 0.0
  %566 = vmatprep.subr.mxu0 0.0
  %567 = vmatpush1.msra.mxu0 0.0
  %568 = vmatprep.subr.mxu0 0.0
  %569 = vmatpush1.msra.mxu0 0.0
  %570 = vmatprep.subr.mxu0 0.0
  %571 = vmatpush1.msra.mxu0 0.0
  %572 = vmatprep.subr.mxu0 0.0
  %573 = vmatpush1.msra.mxu0 0.0
  %574 = vmatprep.subr.mxu0 0.0
  %575 = vmatpush1.msra.mxu0 0.0
  %576 = vmatprep.subr.mxu0 0.0
  %577 = vmatpush1.msra.mxu0 0.0
  %578 = vmatprep.subr.mxu0 0.0
  %579 = vmatpush1.msra.mxu0 0.0
  %580 = vmatprep.subr.mxu0 0.0
  %581 = vmatpush1.msra.mxu0 0.0
  %582 = vmatprep.subr.mxu0 0.0
  %583 = vmatpush1.msra.mxu0 0.0
  %584 = vmatprep.subr.mxu0 0.0
  %585 = vmatpush1.msra.mxu0 0.0
  %586 = vmatprep.subr.mxu0 0.0
  %587 = vmatpush1.msra.mxu0 0.0
  %588 = vmatprep.subr.mxu0 0.0
  %589 = vmatpush1.msra.mxu0 0.0
  %590 = vmatprep.subr.mxu0 0.0
  %591 = vmatpush1.msra.mxu0 0.0
  %592 = vmatprep.subr.mxu0 0.0
  %593 = vmatpush1.msra.mxu0 0.0
  %594 = vmatprep.subr.mxu0 0.0
  %595 = vmatpush1.msra.mxu0 0.0
  %596 = vmatprep.subr.mxu0 0.0
  %597 = vmatpush1.msra.mxu0 0.0
  %598 = vmatprep.mubr.f32.mxu0 0.0
  %599 = vmatmul.mubr.f32.gmra.mrb[0].mxu0 %v532
  %v600 = vpop.f32.mrb[0].mxu0
  %v601 = vadd.f32 0.0, %v600
  %v602 = vpop.f32.mrb[0].mxu0
  %603 = vdwg.mxu0
  %v604 = vadd.f32 %v528, %v601
  %v605 = vxor.u32 %v604, 2147483648
  %v606 = vmul.f32 %v605, 1.442695
  %v607 = vpow.pop %v606
  %v608 = vadd.f32 %v607, 1.0
  %v609 = vrcp.pop %v608
  %v610 = vmul.f32 1.0, %v609
  %v611 = vtanh.pop %v604
  %v612 = vmul.f32 %v610, %v521
  %614 = vrot.lane.b32.xlu0 %v611, 80
  %v615 = vpop.permute.xlu0 %614
  %v617 = vmul.f32 %v610, %v615
  %619 = vrot.lane.b32.xlu0 %v617, 16
  %v620 = vpop.permute.xlu0 %619
  %v622 = vadd.f32 %v612, %v620
  %v623 = vtanh.pop %v622
  %625 = vrot.lane.b32.xlu0 %v623, 16
  %v626 = vpop.permute.xlu0 %625
  %v628 = vmul.f32 %v610, %v626
  %v629 = vld [vmem:[#allocation2 + $0xa] sm:$0x3]
  %631 = vrot.lane.b32.xlu0 %v628, 96
  %v632 = vpop.permute.xlu0 %631
  %v633 = vsel %vm126, %v632, 0
  %635 = vmatprep.subr.mxu0 0.0
  %636 = vmatpush1.msra.mxu0 %v123
  %637 = vmatprep.subr.mxu0 0.0
  %638 = vmatpush1.msra.mxu0 %v124
  %639 = vmatprep.subr.mxu0 0.0
  %640 = vmatpush1.msra.mxu0 0.0
  %641 = vmatprep.subr.mxu0 0.0
  %642 = vmatpush1.msra.mxu0 0.0
  %643 = vmatprep.subr.mxu0 0.0
  %644 = vmatpush1.msra.mxu0 0.0
  %645 = vmatprep.subr.mxu0 0.0
  %646 = vmatpush1.msra.mxu0 0.0
  %647 = vmatprep.subr.mxu0 0.0
  %648 = vmatpush1.msra.mxu0 0.0
  %649 = vmatprep.subr.mxu0 0.0
  %650 = vmatpush1.msra.mxu0 0.0
  %651 = vmatprep.subr.mxu0 0.0
  %652 = vmatpush1.msra.mxu0 0.0
  %653 = vmatprep.subr.mxu0 0.0
  %654 = vmatpush1.msra.mxu0 0.0
  %655 = vmatprep.subr.mxu0 0.0
  %656 = vmatpush1.msra.mxu0 0.0
  %657 = vmatprep.subr.mxu0 0.0
  %658 = vmatpush1.msra.mxu0 0.0
  %659 = vmatprep.subr.mxu0 0.0
  %660 = vmatpush1.msra.mxu0 0.0
  %661 = vmatprep.subr.mxu0 0.0
  %662 = vmatpush1.msra.mxu0 0.0
  %663 = vmatprep.subr.mxu0 0.0
  %664 = vmatpush1.msra.mxu0 0.0
  %665 = vmatprep.subr.mxu0 0.0
  %666 = vmatpush1.msra.mxu0 0.0
  %667 = vmatprep.subr.mxu0 0.0
  %668 = vmatpush1.msra.mxu0 0.0
  %669 = vmatprep.subr.mxu0 0.0
  %670 = vmatpush1.msra.mxu0 0.0
  %671 = vmatprep.subr.mxu0 0.0
  %672 = vmatpush1.msra.mxu0 0.0
  %673 = vmatprep.subr.mxu0 0.0
  %674 = vmatpush1.msra.mxu0 0.0
  %675 = vmatprep.subr.mxu0 0.0
  %676 = vmatpush1.msra.mxu0 0.0
  %677 = vmatprep.subr.mxu0 0.0
  %678 = vmatpush1.msra.mxu0 0.0
  %679 = vmatprep.subr.mxu0 0.0
  %680 = vmatpush1.msra.mxu0 0.0
  %681 = vmatprep.subr.mxu0 0.0
  %682 = vmatpush1.msra.mxu0 0.0
  %683 = vmatprep.subr.mxu0 0.0
  %684 = vmatpush1.msra.mxu0 0.0
  %685 = vmatprep.subr.mxu0 0.0
  %686 = vmatpush1.msra.mxu0 0.0
  %687 = vmatprep.subr.mxu0 0.0
  %688 = vmatpush1.msra.mxu0 0.0
  %689 = vmatprep.subr.mxu0 0.0
  %690 = vmatpush1.msra.mxu0 0.0
  %691 = vmatprep.subr.mxu0 0.0
  %692 = vmatpush1.msra.mxu0 0.0
  %693 = vmatprep.subr.mxu0 0.0
  %694 = vmatpush1.msra.mxu0 0.0
  %695 = vmatprep.subr.mxu0 0.0
  %696 = vmatpush1.msra.mxu0 0.0
  %697 = vmatprep.subr.mxu0 0.0
  %698 = vmatpush1.msra.mxu0 0.0
  %699 = vmatprep.mubr.f32.mxu0 0.0
  %700 = vmatmul.mubr.f32.gmra.mrb[0].mxu0 %v633
  %v701 = vpop.f32.mrb[0].mxu0
  %v702 = vadd.f32 0.0, %v701
  %v703 = vpop.f32.mrb[0].mxu0
  %704 = vdwg.mxu0
  %v705 = vadd.f32 %v629, %v702
  %v706 = vxor.u32 %v705, 2147483648
  %v707 = vmul.f32 %v706, 1.442695
  %v708 = vpow.pop %v707
  %v709 = vadd.f32 %v708, 1.0
  %v710 = vrcp.pop %v709
  %v711 = vmul.f32 1.0, %v710
  %v712 = vtanh.pop %v705
  %v713 = vmul.f32 %v711, %v622
  %715 = vrot.lane.b32.xlu0 %v712, 80
  %v716 = vpop.permute.xlu0 %715
  %v718 = vmul.f32 %v711, %v716
  %720 = vrot.lane.b32.xlu0 %v718, 16
  %v721 = vpop.permute.xlu0 %720
  %v723 = vadd.f32 %v713, %v721
  %v724 = vtanh.pop %v723
  %726 = vrot.lane.b32.xlu0 %v724, 16
  %v727 = vpop.permute.xlu0 %726
  %v729 = vmul.f32 %v711, %v727
  %v730 = vld [vmem:[#allocation2 + $0xc] sm:$0x3]
  %732 = vrot.lane.b32.xlu0 %v729, 96
  %v733 = vpop.permute.xlu0 %732
  %v734 = vsel %vm126, %v733, 0
  %736 = vmatprep.subr.mxu0 0.0
  %737 = vmatpush1.msra.mxu0 %v123
  %738 = vmatprep.subr.mxu0 0.0
  %739 = vmatpush1.msra.mxu0 %v124
  %740 = vmatprep.subr.mxu0 0.0
  %741 = vmatpush1.msra.mxu0 0.0
  %742 = vmatprep.subr.mxu0 0.0
  %743 = vmatpush1.msra.mxu0 0.0
  %744 = vmatprep.subr.mxu0 0.0
  %745 = vmatpush1.msra.mxu0 0.0
  %746 = vmatprep.subr.mxu0 0.0
  %747 = vmatpush1.msra.mxu0 0.0
  %748 = vmatprep.subr.mxu0 0.0
  %749 = vmatpush1.msra.mxu0 0.0
  %750 = vmatprep.subr.mxu0 0.0
  %751 = vmatpush1.msra.mxu0 0.0
  %752 = vmatprep.subr.mxu0 0.0
  %753 = vmatpush1.msra.mxu0 0.0
  %754 = vmatprep.subr.mxu0 0.0
  %755 = vmatpush1.msra.mxu0 0.0
  %756 = vmatprep.subr.mxu0 0.0
  %757 = vmatpush1.msra.mxu0 0.0
  %758 = vmatprep.subr.mxu0 0.0
  %759 = vmatpush1.msra.mxu0 0.0
  %760 = vmatprep.subr.mxu0 0.0
  %761 = vmatpush1.msra.mxu0 0.0
  %762 = vmatprep.subr.mxu0 0.0
  %763 = vmatpush1.msra.mxu0 0.0
  %764 = vmatprep.subr.mxu0 0.0
  %765 = vmatpush1.msra.mxu0 0.0
  %766 = vmatprep.subr.mxu0 0.0
  %767 = vmatpush1.msra.mxu0 0.0
  %768 = vmatprep.subr.mxu0 0.0
  %769 = vmatpush1.msra.mxu0 0.0
  %770 = vmatprep.subr.mxu0 0.0
  %771 = vmatpush1.msra.mxu0 0.0
  %772 = vmatprep.subr.mxu0 0.0
  %773 = vmatpush1.msra.mxu0 0.0
  %774 = vmatprep.subr.mxu0 0.0
  %775 = vmatpush1.msra.mxu0 0.0
  %776 = vmatprep.subr.mxu0 0.0
  %777 = vmatpush1.msra.mxu0 0.0
  %778 = vmatprep.subr.mxu0 0.0
  %779 = vmatpush1.msra.mxu0 0.0
  %780 = vmatprep.subr.mxu0 0.0
  %781 = vmatpush1.msra.mxu0 0.0
  %782 = vmatprep.subr.mxu0 0.0
  %783 = vmatpush1.msra.mxu0 0.0
  %784 = vmatprep.subr.mxu0 0.0
  %785 = vmatpush1.msra.mxu0 0.0
  %786 = vmatprep.subr.mxu0 0.0
  %787 = vmatpush1.msra.mxu0 0.0
  %788 = vmatprep.subr.mxu0 0.0
  %789 = vmatpush1.msra.mxu0 0.0
  %790 = vmatprep.subr.mxu0 0.0
  %791 = vmatpush1.msra.mxu0 0.0
  %792 = vmatprep.subr.mxu0 0.0
  %793 = vmatpush1.msra.mxu0 0.0
  %794 = vmatprep.subr.mxu0 0.0
  %795 = vmatpush1.msra.mxu0 0.0
  %796 = vmatprep.subr.mxu0 0.0
  %797 = vmatpush1.msra.mxu0 0.0
  %798 = vmatprep.subr.mxu0 0.0
  %799 = vmatpush1.msra.mxu0 0.0
  %800 = vmatprep.mubr.f32.mxu0 0.0
  %801 = vmatmul.mubr.f32.gmra.mrb[0].mxu0 %v734
  %v802 = vpop.f32.mrb[0].mxu0
  %v803 = vadd.f32 0.0, %v802
  %v804 = vpop.f32.mrb[0].mxu0
  %805 = vdwg.mxu0
  %v806 = vadd.f32 %v730, %v803
  %v807 = vxor.u32 %v806, 2147483648
  %v808 = vmul.f32 %v807, 1.442695
  %v809 = vpow.pop %v808
  %v810 = vadd.f32 %v809, 1.0
  %v811 = vrcp.pop %v810
  %v812 = vmul.f32 1.0, %v811
  %v813 = vtanh.pop %v806
  %v814 = vmul.f32 %v812, %v723
  %816 = vrot.lane.b32.xlu0 %v813, 80
  %v817 = vpop.permute.xlu0 %816
  %v819 = vmul.f32 %v812, %v817
  %821 = vrot.lane.b32.xlu0 %v819, 16
  %v822 = vpop.permute.xlu0 %821
  %v824 = vadd.f32 %v814, %v822
  %v825 = vtanh.pop %v824
  %827 = vrot.lane.b32.xlu0 %v825, 16
  %v828 = vpop.permute.xlu0 %827
  %v830 = vmul.f32 %v812, %v828
  %v831 = vld [vmem:[#allocation2 + $0xe] sm:$0x3]
  %833 = vrot.lane.b32.xlu0 %v830, 96
  %v834 = vpop.permute.xlu0 %833
  %v835 = vsel %vm126, %v834, 0
  %837 = vmatprep.subr.mxu0 0.0
  %838 = vmatpush1.msra.mxu0 %v123
  %839 = vmatprep.subr.mxu0 0.0
  %840 = vmatpush1.msra.mxu0 %v124
  %841 = vmatprep.subr.mxu0 0.0
  %842 = vmatpush1.msra.mxu0 0.0
  %843 = vmatprep.subr.mxu0 0.0
  %844 = vmatpush1.msra.mxu0 0.0
  %845 = vmatprep.subr.mxu0 0.0
  %846 = vmatpush1.msra.mxu0 0.0
  %847 = vmatprep.subr.mxu0 0.0
  %848 = vmatpush1.msra.mxu0 0.0
  %849 = vmatprep.subr.mxu0 0.0
  %850 = vmatpush1.msra.mxu0 0.0
  %851 = vmatprep.subr.mxu0 0.0
  %852 = vmatpush1.msra.mxu0 0.0
  %853 = vmatprep.subr.mxu0 0.0
  %854 = vmatpush1.msra.mxu0 0.0
  %855 = vmatprep.subr.mxu0 0.0
  %856 = vmatpush1.msra.mxu0 0.0
  %857 = vmatprep.subr.mxu0 0.0
  %858 = vmatpush1.msra.mxu0 0.0
  %859 = vmatprep.subr.mxu0 0.0
  %860 = vmatpush1.msra.mxu0 0.0
  %861 = vmatprep.subr.mxu0 0.0
  %862 = vmatpush1.msra.mxu0 0.0
  %863 = vmatprep.subr.mxu0 0.0
  %864 = vmatpush1.msra.mxu0 0.0
  %865 = vmatprep.subr.mxu0 0.0
  %866 = vmatpush1.msra.mxu0 0.0
  %867 = vmatprep.subr.mxu0 0.0
  %868 = vmatpush1.msra.mxu0 0.0
  %869 = vmatprep.subr.mxu0 0.0
  %870 = vmatpush1.msra.mxu0 0.0
  %871 = vmatprep.subr.mxu0 0.0
  %872 = vmatpush1.msra.mxu0 0.0
  %873 = vmatprep.subr.mxu0 0.0
  %874 = vmatpush1.msra.mxu0 0.0
  %875 = vmatprep.subr.mxu0 0.0
  %876 = vmatpush1.msra.mxu0 0.0
  %877 = vmatprep.subr.mxu0 0.0
  %878 = vmatpush1.msra.mxu0 0.0
  %879 = vmatprep.subr.mxu0 0.0
  %880 = vmatpush1.msra.mxu0 0.0
  %881 = vmatprep.subr.mxu0 0.0
  %882 = vmatpush1.msra.mxu0 0.0
  %883 = vmatprep.subr.mxu0 0.0
  %884 = vmatpush1.msra.mxu0 0.0
  %885 = vmatprep.subr.mxu0 0.0
  %886 = vmatpush1.msra.mxu0 0.0
  %887 = vmatprep.subr.mxu0 0.0
  %888 = vmatpush1.msra.mxu0 0.0
  %889 = vmatprep.subr.mxu0 0.0
  %890 = vmatpush1.msra.mxu0 0.0
  %891 = vmatprep.subr.mxu0 0.0
  %892 = vmatpush1.msra.mxu0 0.0
  %893 = vmatprep.subr.mxu0 0.0
  %894 = vmatpush1.msra.mxu0 0.0
  %895 = vmatprep.subr.mxu0 0.0
  %896 = vmatpush1.msra.mxu0 0.0
  %897 = vmatprep.subr.mxu0 0.0
  %898 = vmatpush1.msra.mxu0 0.0
  %899 = vmatprep.subr.mxu0 0.0
  %900 = vmatpush1.msra.mxu0 0.0
  %901 = vmatprep.mubr.f32.mxu0 0.0
  %902 = vmatmul.mubr.f32.gmra.mrb[0].mxu0 %v835
  %v903 = vpop.f32.mrb[0].mxu0
  %v904 = vadd.f32 0.0, %v903
  %v905 = vpop.f32.mrb[0].mxu0
  %906 = vdwg.mxu0
  %v907 = vadd.f32 %v831, %v904
  %v908 = vxor.u32 %v907, 2147483648
  %v909 = vmul.f32 %v908, 1.442695
  %v910 = vpow.pop %v909
  %v911 = vadd.f32 %v910, 1.0
  %v912 = vrcp.pop %v911
  %v913 = vmul.f32 1.0, %v912
  %v914 = vtanh.pop %v907
  %v915 = vmul.f32 %v913, %v824
  %917 = vrot.lane.b32.xlu0 %v914, 80
  %v918 = vpop.permute.xlu0 %917
  %v920 = vmul.f32 %v913, %v918
  %922 = vrot.lane.b32.xlu0 %v920, 16
  %v923 = vpop.permute.xlu0 %922
  %v925 = vadd.f32 %v915, %v923
  %v926 = vtanh.pop %v925
  %928 = vrot.lane.b32.xlu0 %v926, 16
  %v929 = vpop.permute.xlu0 %928
  %v931 = vmul.f32 %v913, %v929
  %v932 = vld [vmem:[%s4] sm:$0x1]
  %v934 = vlaneseq
  %v935 = vshrl.u32 %v934, 7
  %v936 = vsub.s32 0, %v935
  %v937 = vrot.slane %v932, %v936
  %938 = vrot.lane.b32.xlu0 %v937, 32
  %v939 = vpop.permute.xlu0 %938
  %v941 = vmul.f32 %v931, %v939
  %943 = vrot.lane.b32.xlu0 %v941, 96
  %v944 = vpop.permute.xlu0 %943
  %vm946 = vcmask 123904
  %v947 = vsel %vm946, %v944, 0.0
  %948 = vadd.xlane.f32.xlu0 %v947
  %v949 = vpop.xlane.xlu0 %948
  %s950 = sld [smem:[#allocation3]]
  %v951 = vstv %s950
  %v952 = vadd.f32 %v949, %v951
  %vm953 = vcmask 1024
  %954 = vst.msk [vmem:[%s6] sm:$0x3] %vm953, %v952
  // Predicated region
  $region26: #{multi_feature_lstm.1} parent=0 // pred_check
    _
  $region27: #{multi_feature_lstm.1} parent=0 // pred_check_branch
    %956 = sbr.rel (0) target = $region29
  $region28: #{multi_feature_lstm.1} parent=0 // pred_region
    _
  $region29: #{multi_feature_lstm.1} parent=0 // pred_fallthru
    _
  // Predicated region
  $region30: #{multi_feature_lstm.1} parent=0 // pred_check
    _
  $region31: #{multi_feature_lstm.1} parent=0 // pred_check_branch
    %958 = sbr.rel (0) target = $region33
  $region32: #{multi_feature_lstm.1} parent=0 // pred_region
    _
  $region33: #{multi_feature_lstm.1} parent=0 // pred_fallthru
    _

</llo_original>
